<compile_context>
chip_gen: v7x
topology: tpu7x:2x2x1
jax: 0.10.0
libtpu: 0.0.40
codegen_flags: <defaults>
</compile_context>

<pallas_src>
import jax
import jax.numpy as jnp
from jax.experimental import pallas as pl
from jax.experimental.pallas import tpu as pltpu

# Fixed constant, matching torch.tensor(10.0). Baked into the kernel body
# (valid because the PyTorch module never trains it).
_SUPER_PARAMETER = 10.0


def _combine_loss_kernel(loss_ref, cola_ref, out_ref):
    # All refs are (1,) f32 in SMEM — pure scalar path, no vregs touched.
    out_ref[0] = loss_ref[0] + cola_ref[0] * _SUPER_PARAMETER


def _as_smem_scalar(x):
    """Minimal canonicalization to a (1,) f32 array; no-op HLO when already there."""
    x = jnp.asarray(x)
    if x.dtype != jnp.float32:
        x = x.astype(jnp.float32)
    if x.shape != (1,):
        x = x.reshape(1)
    return x


def _combine_loss_pallas_fwd_impl(loss, cola_loss):
    loss1 = _as_smem_scalar(loss)
    cola1 = _as_smem_scalar(cola_loss)
    out = pl.pallas_call(
        _combine_loss_kernel,
        out_shape=jax.ShapeDtypeStruct((1,), jnp.float32),
        in_specs=[
            pl.BlockSpec(memory_space=pltpu.SMEM),
            pl.BlockSpec(memory_space=pltpu.SMEM),
        ],
        out_specs=pl.BlockSpec(memory_space=pltpu.SMEM),
        cost_estimate=pl.CostEstimate(flops=2, transcendentals=0, bytes_accessed=12),
    )(loss1, cola1)
    return out[0]  # scalar, like the PyTorch module


@jax.custom_vjp
def _combine_loss_pallas(loss, cola_loss):
    return _combine_loss_pallas_fwd_impl(loss, cola_loss)


def _combine_loss_pallas_fwd(loss, cola_loss):
    return _combine_loss_pallas_fwd_impl(loss, cola_loss), None


def _combine_loss_pallas_bwd(_, g):
    # d/dloss = 1, d/dcola = superParameter. Plain jnp — fuses into the
    # backward graph, no extra custom call.
    g = jnp.asarray(g, jnp.float32)
    return (g, g * _SUPER_PARAMETER)


_combine_loss_pallas.defvjp(_combine_loss_pallas_fwd, _combine_loss_pallas_bwd)


def combine_loss_pallas(loss, cola_loss, epoch=None):
    """Pallas-kernel version of CombineLoss.forward(loss, cola_loss, epoch).
    Differentiable w.r.t. (loss, cola_loss) via custom_vjp."""
    del epoch  # unused in the module's active forward path
    return _combine_loss_pallas(loss, cola_loss)


def combine_loss_fused(loss, cola_loss, epoch=None):
    """Recommended production path: plain jnp FMA — fuses into the upstream
    loss epilogue and differentiates natively."""
    del epoch
    return (jnp.asarray(loss, jnp.float32)
            + jnp.asarray(cola_loss, jnp.float32) * _SUPER_PARAMETER)


if __name__ == "__main__":
    key = jax.random.PRNGKey(0)
    k1, k2 = jax.random.split(key)

    # Deterministic small scalar "losses" (typical outputs of upstream criteria).
    loss = jax.random.uniform(k1, (), jnp.float32)        # main task loss
    cola_loss = jax.random.uniform(k2, (), jnp.float32)   # auxiliary CoLA loss
    epoch = 3                                             # unused by forward

    # Forward.
    result = combine_loss_pallas(loss, cola_loss, epoch)
    result = jax.block_until_ready(result)

    expected = combine_loss_fused(loss, cola_loss, epoch)
    expected = jax.block_until_ready(expected)
    assert jnp.allclose(result, expected, rtol=1e-6, atol=1e-6), (result, expected)

    # Backward (custom_vjp): a combined loss lives under jax.grad in fine-tuning.
    g_loss, g_cola = jax.grad(
        lambda a, b: combine_loss_pallas(a, b, epoch), argnums=(0, 1)
    )(loss, cola_loss)
    g_loss = jax.block_until_ready(g_loss)
    g_cola = jax.block_until_ready(g_cola)
    assert jnp.allclose(g_loss, 1.0, rtol=1e-6, atol=1e-6), g_loss
    assert jnp.allclose(g_cola, _SUPER_PARAMETER, rtol=1e-6, atol=1e-6), g_cola

    print("KERNEL_OK")
</pallas_src>

<mosaic_0001>
module attributes {stable_mosaic.version = 11 : i64} {
  func.func @_combine_loss_kernel(%arg0: memref<1xf32, #tpu.memory_space<smem>>, %arg1: memref<1xf32, #tpu.memory_space<smem>>, %arg2: memref<1xf32, #tpu.memory_space<smem>>) attributes {dimension_semantics = [], scalar_prefetch = 0 : i64, scratch_operands = 0 : i64, tpu.core_type = #tpu.core_type<tc>} {
    %c0 = arith.constant 0 : index
    %0 = memref.load %arg0[%c0] : memref<1xf32, #tpu.memory_space<smem>>
    %c0_0 = arith.constant 0 : index
    %1 = memref.load %arg1[%c0_0] : memref<1xf32, #tpu.memory_space<smem>>
    %cst = arith.constant 1.000000e+01 : f32
    %2 = arith.mulf %1, %cst : f32
    %3 = arith.addf %0, %2 : f32
    %c0_1 = arith.constant 0 : index
    %4 = memref.load %arg2[%c0_1] : memref<1xf32, #tpu.memory_space<smem>>
    memref.store %3, %arg2[%c0_1] : memref<1xf32, #tpu.memory_space<smem>>
    return
  }
}

</mosaic_0001>

<llo_original>
// kernel: tpu_custom_call.1
$region0: #{tpu_custom_call.1}
  #allocation0 [shape = 'u32[]', space=smem, size = 0x4, offset = 0x4, fixed_abs, tag = 'smem constant byte address 0x4 - core index']
  #allocation1 [shape = 'u32[144,128]{1,0:T(1,128)}', space=vmem, size = 0x12000, scoped, tag = 'internal scratch']
  #allocation2 [shape = 'f32[1]{0:T(128)S(6)}', space=smem, size = 0x200, scoped, tag = 'scoped memory for tpu_custom_call.1']
  #allocation3 [shape = 'f32[1]{0:T(128)S(6)}', space=smem, size = 0x200, scoped, tag = 'scoped memory for tpu_custom_call.1']
  %s0 = inlined_call_operand.<no memory space> [shape: f32[1], index: 0, kind: input, shape index: {}]
  %s1 = inlined_call_operand.<no memory space> [shape: f32[1], index: 1, kind: input, shape index: {}]
  %s2 = inlined_call_operand.hbm [shape: f32[1], index: 2, kind: output, shape index: {}]
  %s3 = sld [smem:[#allocation0]]
  $region18: #{tpu_custom_call.1} parent=0
    _
  %s5 = ssub.s32 1, %s3
  %s6 = scalar_select 0, %s5, %s3
  %7 = sst [smem:[#allocation2]] %s0
  %8 = sst [smem:[#allocation3]] %s1
  $region1: #{tpu_custom_call.1} parent=0
    #allocation4 [shape = 'u8[512]{0}', space=smem, size = 0x200, scoped, tag = 'output window, operand 0, single buffered']
    #allocation5 [shape = 's32[1]{0}', space=sflag, size = 0x4, scoped, tag = 'scoped memory for tpu_custom_call.1']
    %9 = vsyncpa [#allocation5], 0
    // Predicated region
    $region2: #{tpu_custom_call.1} parent=1 // pred_check
      _
    $region3: #{tpu_custom_call.1} parent=1 // pred_check_branch
      %11 = sbr.rel (0) target = $region5
    $region4: #{tpu_custom_call.1} parent=1 // pred_region
      _
    $region5: #{tpu_custom_call.1} parent=1 // pred_fallthru
      _
    // Predicated region
    $region6: #{tpu_custom_call.1} parent=1 // pred_check
      _
    $region7: #{tpu_custom_call.1} parent=1 // pred_check_branch
      %13 = sbr.rel (0) target = $region9
    $region8: #{tpu_custom_call.1} parent=1 // pred_region
      _
    $region9: #{tpu_custom_call.1} parent=1 // pred_fallthru
      _
    %s14 = sld [smem:[#allocation2]]
    %s15 = sld [smem:[#allocation3]]
    %s16 = smul.f32 %s15, 10.0
    %s17 = sadd.f32 %s14, %s16
    %s18 = scalar_lea.smem [#allocation4], 0
    %19 = sst [smem:[%s18]] %s17
    // Predicated region
    $region10: #{tpu_custom_call.1} parent=1 // pred_check
      _
    $region11: #{tpu_custom_call.1} parent=1 // pred_check_branch
      %21 = sbr.rel (0) target = $region13
    $region12: #{tpu_custom_call.1} parent=1 // pred_region
      %s23 = ssub.s32 16, 16
      %24 = vsyncadd [#allocation5], %s23
      %27 = dma.smem_to_hbm [#allocation4], 16, %s2, [#allocation5]
    $region13: #{tpu_custom_call.1} parent=1 // pred_fallthru
      _
    // Predicated region
    $region14: #{tpu_custom_call.1} parent=1 // pred_check
      _
    $region15: #{tpu_custom_call.1} parent=1 // pred_check_branch
      %29 = sbr.rel (0) target = $region17
    $region16: #{tpu_custom_call.1} parent=1 // pred_region
      %30 = dma.done [#allocation5], 16
    $region17: #{tpu_custom_call.1} parent=1 // pred_fallthru
      _
    %31 = sfence
    %32 = vsyncpa [#allocation5], 1

</llo_original>
